<compile_context>
chip_gen: v7x
topology: tpu7x:2x2x1
jax: 0.10.0
libtpu: 0.0.40
codegen_flags: <defaults>
</compile_context>

<pallas_src>
import functools

import jax
import jax.numpy as jnp
from jax.experimental import pallas as pl
from jax.experimental.pallas import tpu as pltpu

HIDDEN = 128
LANE = 128  # output is padded to a multiple of 128 lanes


def _round_up(x, m):
    return (x + m - 1) // m * m


def actor_kernel(split_sizes, out_pad,
                 x_ref, w1_ref, b1_ref, w2_ref, b2_ref, w3_ref, b3_ref,
                 out_ref):
    # ---- MLP hot path: 3 MXU matmuls (bf16 operands, f32 accumulation) ----
    x = x_ref[...].astype(jnp.bfloat16)
    h1 = jnp.dot(x, w1_ref[...], preferred_element_type=jnp.float32) + b1_ref[...]
    h1 = jnp.maximum(h1, 0.0)
    h2 = jnp.dot(h1.astype(jnp.bfloat16), w2_ref[...],
                 preferred_element_type=jnp.float32) + b2_ref[...]
    h2 = jnp.maximum(h2, 0.0)
    logits = jnp.dot(h2.astype(jnp.bfloat16), w3_ref[...],
                     preferred_element_type=jnp.float32) + b3_ref[...]

    # ---- Mask-based segmented softmax over the padded 128-lane logits ----
    lane = jax.lax.broadcasted_iota(jnp.int32, (1, out_pad), 1)
    neg_inf = jnp.float32(-1e30)

    # Per-lane max map (segment max broadcast back onto its lanes).
    max_map = jnp.zeros_like(logits)
    masks = []
    off = 0
    for sz in split_sizes:
        m = (lane >= off) & (lane < off + sz)          # (1, out_pad)
        masks.append(m)
        seg_max = jnp.max(jnp.where(m, logits, neg_inf), axis=-1, keepdims=True)
        max_map = jnp.where(m, seg_max, max_map)
        off += sz
    valid = lane < off                                  # real (unpadded) lanes

    # One full-width exp; padded lanes zeroed.
    e = jnp.where(valid, jnp.exp(logits - max_map), 0.0)

    # Per-lane reciprocal-of-segment-sum map (EUP vrcp).
    inv_map = jnp.zeros_like(logits)
    for m in masks:
        seg_sum = jnp.sum(jnp.where(m, e, 0.0), axis=-1, keepdims=True)
        inv_map = jnp.where(m, pl.reciprocal(seg_sum, approx=True), inv_map)

    # Single unmasked lane-dense store (padded lanes are exactly 0).
    out_ref[...] = (e * inv_map).astype(out_ref.dtype)


def prepare_params(params, split_sizes):
    """One-time prep: cast weights to bf16, pad the output layer to 128 lanes."""
    w1, b1, w2, b2, w3, b3 = params
    total = sum(split_sizes)
    out_pad = _round_up(total, LANE)

    w3p = jnp.zeros((w3.shape[0], out_pad), jnp.float32).at[:, :total].set(w3)
    b3p = jnp.zeros((1, out_pad), jnp.float32).at[:, :total].set(b3)

    return (w1.astype(jnp.bfloat16), b1.astype(jnp.float32),
            w2.astype(jnp.bfloat16), b2.astype(jnp.float32),
            w3p.astype(jnp.bfloat16), b3p.astype(jnp.float32)), out_pad


def actor_forward(state, prepared_params, split_sizes, out_pad,
                  max_tile_b=512, split_outputs=True):
    """Actor forward pass. Returns a list of per-action probability arrays
    (matching torch.split semantics), or the single lane-dense (B, total)
    array when split_outputs=False (cheaper for downstream consumers)."""
    w1, b1, w2, b2, w3, b3 = prepared_params
    B, state_dim = state.shape
    total = sum(split_sizes)

    # Batch tiling: multiple of 16 (bf16 sublane packing), capped for VMEM.
    tile_b = min(max_tile_b, _round_up(B, 16))
    b_pad = _round_up(B, tile_b)
    if b_pad != B:
        state = jnp.zeros((b_pad, state_dim), state.dtype).at[:B].set(state)

    kernel = functools.partial(actor_kernel, tuple(split_sizes), out_pad)
    const = lambda shape: pl.BlockSpec(shape, lambda i: (0, 0))

    probs_full = pl.pallas_call(
        kernel,
        out_shape=jax.ShapeDtypeStruct((b_pad, out_pad), jnp.float32),
        grid=(b_pad // tile_b,),
        in_specs=[
            pl.BlockSpec((tile_b, state_dim), lambda i: (i, 0)),  # activations tile
            const((state_dim, HIDDEN)), const((1, HIDDEN)),       # resident weights
            const((HIDDEN, HIDDEN)), const((1, HIDDEN)),
            const((HIDDEN, out_pad)), const((1, out_pad)),
        ],
        out_specs=pl.BlockSpec((tile_b, out_pad), lambda i: (i, 0)),
        compiler_params=pltpu.CompilerParams(
            dimension_semantics=("parallel",)),
    )(state, w1, b1, w2, b2, w3, b3)

    probs = probs_full[:B, :total]
    if not split_outputs:
        return probs
    # Glue: split the lane-dense result back into a list (matches torch.split).
    out, off = [], 0
    for sz in split_sizes:
        out.append(probs[:, off:off + sz])
        off += sz
    return out


def init_params(key, state_dim, total_action_dim, hidden=HIDDEN):
    """Deterministic synthetic init (PyTorch-Linear-like uniform fan-in scaling)."""
    ks = jax.random.split(key, 6)

    def lin(kw, kb, fan_in, fan_out):
        bound = 1.0 / jnp.sqrt(fan_in)
        w = jax.random.uniform(kw, (fan_in, fan_out), jnp.float32, -bound, bound)
        b = jax.random.uniform(kb, (1, fan_out), jnp.float32, -bound, bound)
        return w, b

    w1, b1 = lin(ks[0], ks[1], state_dim, hidden)
    w2, b2 = lin(ks[2], ks[3], hidden, hidden)
    w3, b3 = lin(ks[4], ks[5], hidden, total_action_dim)
    return (w1, b1, w2, b2, w3, b3)


if __name__ == "__main__":
    key = jax.random.PRNGKey(0)
    k_state, k_params = jax.random.split(key)

    batch = 8
    state_dim = 32
    action_dims = (3, 4, 5)          # MultiDiscrete nvec
    total_action_dim = sum(action_dims)

    state = jax.random.normal(k_state, (batch, state_dim), jnp.float32)
    params = init_params(k_params, state_dim, total_action_dim)

    # TODO(synk): for real RL rollouts, batch many environment steps per call
    # (and/or keep weights resident across calls) to amortize launch + weight DMA.
    prepared, out_pad = prepare_params(params, action_dims)

    probs_list = actor_forward(state, prepared, action_dims, out_pad)
    probs_list = [jax.block_until_ready(p) for p in probs_list]

    # Sanity: each split is a proper softmax (rows ~sum to 1) with the right shape.
    # Tolerance loosened vs exact divide because of pl.reciprocal(approx=True).
    ok = True
    for p, sz in zip(probs_list, action_dims):
        ok &= (p.shape == (batch, sz))
        ok &= bool(jnp.allclose(jnp.sum(p, axis=-1), 1.0, atol=1e-2))
        ok &= bool(jnp.all(p >= 0.0))
    if ok:
        print("KERNEL_OK")
    else:
        raise SystemExit("actor kernel output check failed")
</pallas_src>

<mosaic_0001>
module attributes {stable_mosaic.version = 11 : i64} {
  func.func @actor_kernel(%arg0: i32, %arg1: memref<16x32xf32, #tpu.memory_space<vmem>>, %arg2: memref<32x128xbf16, #tpu.memory_space<vmem>>, %arg3: memref<1x128xf32, #tpu.memory_space<vmem>>, %arg4: memref<128x128xbf16, #tpu.memory_space<vmem>>, %arg5: memref<1x128xf32, #tpu.memory_space<vmem>>, %arg6: memref<128x128xbf16, #tpu.memory_space<vmem>>, %arg7: memref<1x128xf32, #tpu.memory_space<vmem>>, %arg8: memref<16x128xf32, #tpu.memory_space<vmem>>) attributes {dimension_semantics = [#tpu.dimension_semantics<parallel>], iteration_bounds = array<i64: 1>, scalar_prefetch = 0 : i64, scratch_operands = 0 : i64, tpu.core_type = #tpu.core_type<tc>, window_params = [{transform_indices = @transform_0, window_bounds = array<i64: 16, 32>}, {pipeline_mode = #tpu.pipeline_mode<synchronous>, transform_indices = @transform_1, window_bounds = array<i64: 32, 128>}, {pipeline_mode = #tpu.pipeline_mode<synchronous>, transform_indices = @transform_2, window_bounds = array<i64: 1, 128>}, {pipeline_mode = #tpu.pipeline_mode<synchronous>, transform_indices = @transform_3, window_bounds = array<i64: 128, 128>}, {pipeline_mode = #tpu.pipeline_mode<synchronous>, transform_indices = @transform_4, window_bounds = array<i64: 1, 128>}, {pipeline_mode = #tpu.pipeline_mode<synchronous>, transform_indices = @transform_5, window_bounds = array<i64: 128, 128>}, {pipeline_mode = #tpu.pipeline_mode<synchronous>, transform_indices = @transform_6, window_bounds = array<i64: 1, 128>}, {transform_indices = @transform_7, window_bounds = array<i64: 16, 128>}]} {
    %c0 = arith.constant 0 : index
    %c0_0 = arith.constant 0 : index
    %0 = vector.load %arg1[%c0, %c0_0] : memref<16x32xf32, #tpu.memory_space<vmem>>, vector<16x32xf32>
    %1 = arith.truncf %0 : vector<16x32xf32> to vector<16x32xbf16>
    %c0_1 = arith.constant 0 : index
    %c0_2 = arith.constant 0 : index
    %2 = vector.load %arg2[%c0_1, %c0_2] : memref<32x128xbf16, #tpu.memory_space<vmem>>, vector<32x128xbf16>
    %cst = arith.constant dense<0.000000e+00> : vector<16x128xf32>
    %3 = tpu.matmul %1, %2, %cst {dimension_numbers = #tpu.dot_dimension_numbers<[1], [0], [0], [1], [0, 0, 1, 1], [], []>} : vector<16x32xbf16>, vector<32x128xbf16>, vector<16x128xf32> -> vector<16x128xf32>
    %c0_3 = arith.constant 0 : index
    %c0_4 = arith.constant 0 : index
    %4 = vector.load %arg3[%c0_3, %c0_4] : memref<1x128xf32, #tpu.memory_space<vmem>>, vector<1x128xf32>
    %5 = vector.broadcast %4 : vector<1x128xf32> to vector<16x128xf32>
    %6 = arith.addf %3, %5 : vector<16x128xf32>
    %cst_5 = arith.constant 0.000000e+00 : f32
    %7 = vector.broadcast %cst_5 : f32 to vector<16x128xf32>
    %8 = arith.maximumf %6, %7 : vector<16x128xf32>
    %9 = arith.truncf %8 : vector<16x128xf32> to vector<16x128xbf16>
    %c0_6 = arith.constant 0 : index
    %c0_7 = arith.constant 0 : index
    %10 = vector.load %arg4[%c0_6, %c0_7] : memref<128x128xbf16, #tpu.memory_space<vmem>>, vector<128x128xbf16>
    %cst_8 = arith.constant dense<0.000000e+00> : vector<16x128xf32>
    %11 = tpu.matmul %9, %10, %cst_8 {dimension_numbers = #tpu.dot_dimension_numbers<[1], [0], [0], [1], [0, 0, 1, 1], [], []>} : vector<16x128xbf16>, vector<128x128xbf16>, vector<16x128xf32> -> vector<16x128xf32>
    %c0_9 = arith.constant 0 : index
    %c0_10 = arith.constant 0 : index
    %12 = vector.load %arg5[%c0_9, %c0_10] : memref<1x128xf32, #tpu.memory_space<vmem>>, vector<1x128xf32>
    %13 = vector.broadcast %12 : vector<1x128xf32> to vector<16x128xf32>
    %14 = arith.addf %11, %13 : vector<16x128xf32>
    %cst_11 = arith.constant 0.000000e+00 : f32
    %15 = vector.broadcast %cst_11 : f32 to vector<16x128xf32>
    %16 = arith.maximumf %14, %15 : vector<16x128xf32>
    %17 = arith.truncf %16 : vector<16x128xf32> to vector<16x128xbf16>
    %c0_12 = arith.constant 0 : index
    %c0_13 = arith.constant 0 : index
    %18 = vector.load %arg6[%c0_12, %c0_13] : memref<128x128xbf16, #tpu.memory_space<vmem>>, vector<128x128xbf16>
    %cst_14 = arith.constant dense<0.000000e+00> : vector<16x128xf32>
    %19 = tpu.matmul %17, %18, %cst_14 {dimension_numbers = #tpu.dot_dimension_numbers<[1], [0], [0], [1], [0, 0, 1, 1], [], []>} : vector<16x128xbf16>, vector<128x128xbf16>, vector<16x128xf32> -> vector<16x128xf32>
    %c0_15 = arith.constant 0 : index
    %c0_16 = arith.constant 0 : index
    %20 = vector.load %arg7[%c0_15, %c0_16] : memref<1x128xf32, #tpu.memory_space<vmem>>, vector<1x128xf32>
    %21 = vector.broadcast %20 : vector<1x128xf32> to vector<16x128xf32>
    %22 = arith.addf %19, %21 : vector<16x128xf32>
    %23 = tpu.iota {dimensions = array<i32: 1>} : vector<1x128xi32>
    %cst_17 = arith.constant 0.000000e+00 : f32
    %24 = vector.broadcast %cst_17 : f32 to vector<16x128xf32>
    %c0_i32 = arith.constant 0 : i32
    %25 = vector.broadcast %c0_i32 : i32 to vector<1x128xi32>
    %26 = arith.cmpi sge, %23, %25 : vector<1x128xi32>
    %c3_i32 = arith.constant 3 : i32
    %27 = vector.broadcast %c3_i32 : i32 to vector<1x128xi32>
    %28 = arith.cmpi slt, %23, %27 : vector<1x128xi32>
    %29 = arith.andi %26, %28 : vector<1x128xi1>
    %cst_18 = arith.constant -1.000000e+30 : f32
    %30 = vector.shape_cast %29 : vector<1x128xi1> to vector<1x128xi1>
    %31 = vector.broadcast %30 : vector<1x128xi1> to vector<16x128xi1>
    %32 = vector.broadcast %cst_18 : f32 to vector<16x128xf32>
    %33 = arith.select %31, %22, %32 : vector<16x128xi1>, vector<16x128xf32>
    %cst_19 = arith.constant dense<0xFF800000> : vector<16xf32>
    %34 = vector.multi_reduction <maximumf>, %33, %cst_19 [1] : vector<16x128xf32> to vector<16xf32>
    %35 = vector.shape_cast %34 : vector<16xf32> to vector<16x1xf32>
    %36 = vector.shape_cast %29 : vector<1x128xi1> to vector<1x128xi1>
    %37 = vector.broadcast %36 : vector<1x128xi1> to vector<16x128xi1>
    %38 = vector.shape_cast %35 : vector<16x1xf32> to vector<16x1xf32>
    %39 = vector.broadcast %38 : vector<16x1xf32> to vector<16x128xf32>
    %40 = arith.select %37, %39, %24 : vector<16x128xi1>, vector<16x128xf32>
    %c3_i32_20 = arith.constant 3 : i32
    %41 = vector.broadcast %c3_i32_20 : i32 to vector<1x128xi32>
    %42 = arith.cmpi sge, %23, %41 : vector<1x128xi32>
    %c7_i32 = arith.constant 7 : i32
    %43 = vector.broadcast %c7_i32 : i32 to vector<1x128xi32>
    %44 = arith.cmpi slt, %23, %43 : vector<1x128xi32>
    %45 = arith.andi %42, %44 : vector<1x128xi1>
    %cst_21 = arith.constant -1.000000e+30 : f32
    %46 = vector.shape_cast %45 : vector<1x128xi1> to vector<1x128xi1>
    %47 = vector.broadcast %46 : vector<1x128xi1> to vector<16x128xi1>
    %48 = vector.broadcast %cst_21 : f32 to vector<16x128xf32>
    %49 = arith.select %47, %22, %48 : vector<16x128xi1>, vector<16x128xf32>
    %cst_22 = arith.constant dense<0xFF800000> : vector<16xf32>
    %50 = vector.multi_reduction <maximumf>, %49, %cst_22 [1] : vector<16x128xf32> to vector<16xf32>
    %51 = vector.shape_cast %50 : vector<16xf32> to vector<16x1xf32>
    %52 = vector.shape_cast %45 : vector<1x128xi1> to vector<1x128xi1>
    %53 = vector.broadcast %52 : vector<1x128xi1> to vector<16x128xi1>
    %54 = vector.shape_cast %51 : vector<16x1xf32> to vector<16x1xf32>
    %55 = vector.broadcast %54 : vector<16x1xf32> to vector<16x128xf32>
    %56 = arith.select %53, %55, %40 : vector<16x128xi1>, vector<16x128xf32>
    %c7_i32_23 = arith.constant 7 : i32
    %57 = vector.broadcast %c7_i32_23 : i32 to vector<1x128xi32>
    %58 = arith.cmpi sge, %23, %57 : vector<1x128xi32>
    %c12_i32 = arith.constant 12 : i32
    %59 = vector.broadcast %c12_i32 : i32 to vector<1x128xi32>
    %60 = arith.cmpi slt, %23, %59 : vector<1x128xi32>
    %61 = arith.andi %58, %60 : vector<1x128xi1>
    %cst_24 = arith.constant -1.000000e+30 : f32
    %62 = vector.shape_cast %61 : vector<1x128xi1> to vector<1x128xi1>
    %63 = vector.broadcast %62 : vector<1x128xi1> to vector<16x128xi1>
    %64 = vector.broadcast %cst_24 : f32 to vector<16x128xf32>
    %65 = arith.select %63, %22, %64 : vector<16x128xi1>, vector<16x128xf32>
    %cst_25 = arith.constant dense<0xFF800000> : vector<16xf32>
    %66 = vector.multi_reduction <maximumf>, %65, %cst_25 [1] : vector<16x128xf32> to vector<16xf32>
    %67 = vector.shape_cast %66 : vector<16xf32> to vector<16x1xf32>
    %68 = vector.shape_cast %61 : vector<1x128xi1> to vector<1x128xi1>
    %69 = vector.broadcast %68 : vector<1x128xi1> to vector<16x128xi1>
    %70 = vector.shape_cast %67 : vector<16x1xf32> to vector<16x1xf32>
    %71 = vector.broadcast %70 : vector<16x1xf32> to vector<16x128xf32>
    %72 = arith.select %69, %71, %56 : vector<16x128xi1>, vector<16x128xf32>
    %c12_i32_26 = arith.constant 12 : i32
    %73 = vector.broadcast %c12_i32_26 : i32 to vector<1x128xi32>
    %74 = arith.cmpi slt, %23, %73 : vector<1x128xi32>
    %75 = arith.subf %22, %72 : vector<16x128xf32>
    %76 = math.exp %75 : vector<16x128xf32>
    %cst_27 = arith.constant 0.000000e+00 : f32
    %77 = vector.shape_cast %74 : vector<1x128xi1> to vector<1x128xi1>
    %78 = vector.broadcast %77 : vector<1x128xi1> to vector<16x128xi1>
    %79 = vector.broadcast %cst_27 : f32 to vector<16x128xf32>
    %80 = arith.select %78, %76, %79 : vector<16x128xi1>, vector<16x128xf32>
    %cst_28 = arith.constant 0.000000e+00 : f32
    %81 = vector.broadcast %cst_28 : f32 to vector<16x128xf32>
    %cst_29 = arith.constant 0.000000e+00 : f32
    %82 = vector.shape_cast %29 : vector<1x128xi1> to vector<1x128xi1>
    %83 = vector.broadcast %82 : vector<1x128xi1> to vector<16x128xi1>
    %84 = vector.broadcast %cst_29 : f32 to vector<16x128xf32>
    %85 = arith.select %83, %80, %84 : vector<16x128xi1>, vector<16x128xf32>
    %cst_30 = arith.constant dense<0.000000e+00> : vector<16xf32>
    %86 = vector.multi_reduction <add>, %85, %cst_30 [1] : vector<16x128xf32> to vector<16xf32>
    %87 = vector.shape_cast %86 : vector<16xf32> to vector<16x1xf32>
    %88 = tpu.reciprocal %87 {approx = true} : vector<16x1xf32> -> vector<16x1xf32>
    %89 = vector.shape_cast %29 : vector<1x128xi1> to vector<1x128xi1>
    %90 = vector.broadcast %89 : vector<1x128xi1> to vector<16x128xi1>
    %91 = vector.shape_cast %88 : vector<16x1xf32> to vector<16x1xf32>
    %92 = vector.broadcast %91 : vector<16x1xf32> to vector<16x128xf32>
    %93 = arith.select %90, %92, %81 : vector<16x128xi1>, vector<16x128xf32>
    %cst_31 = arith.constant 0.000000e+00 : f32
    %94 = vector.shape_cast %45 : vector<1x128xi1> to vector<1x128xi1>
    %95 = vector.broadcast %94 : vector<1x128xi1> to vector<16x128xi1>
    %96 = vector.broadcast %cst_31 : f32 to vector<16x128xf32>
    %97 = arith.select %95, %80, %96 : vector<16x128xi1>, vector<16x128xf32>
    %cst_32 = arith.constant dense<0.000000e+00> : vector<16xf32>
    %98 = vector.multi_reduction <add>, %97, %cst_32 [1] : vector<16x128xf32> to vector<16xf32>
    %99 = vector.shape_cast %98 : vector<16xf32> to vector<16x1xf32>
    %100 = tpu.reciprocal %99 {approx = true} : vector<16x1xf32> -> vector<16x1xf32>
    %101 = vector.shape_cast %45 : vector<1x128xi1> to vector<1x128xi1>
    %102 = vector.broadcast %101 : vector<1x128xi1> to vector<16x128xi1>
    %103 = vector.shape_cast %100 : vector<16x1xf32> to vector<16x1xf32>
    %104 = vector.broadcast %103 : vector<16x1xf32> to vector<16x128xf32>
    %105 = arith.select %102, %104, %93 : vector<16x128xi1>, vector<16x128xf32>
    %cst_33 = arith.constant 0.000000e+00 : f32
    %106 = vector.shape_cast %61 : vector<1x128xi1> to vector<1x128xi1>
    %107 = vector.broadcast %106 : vector<1x128xi1> to vector<16x128xi1>
    %108 = vector.broadcast %cst_33 : f32 to vector<16x128xf32>
    %109 = arith.select %107, %80, %108 : vector<16x128xi1>, vector<16x128xf32>
    %cst_34 = arith.constant dense<0.000000e+00> : vector<16xf32>
    %110 = vector.multi_reduction <add>, %109, %cst_34 [1] : vector<16x128xf32> to vector<16xf32>
    %111 = vector.shape_cast %110 : vector<16xf32> to vector<16x1xf32>
    %112 = tpu.reciprocal %111 {approx = true} : vector<16x1xf32> -> vector<16x1xf32>
    %113 = vector.shape_cast %61 : vector<1x128xi1> to vector<1x128xi1>
    %114 = vector.broadcast %113 : vector<1x128xi1> to vector<16x128xi1>
    %115 = vector.shape_cast %112 : vector<16x1xf32> to vector<16x1xf32>
    %116 = vector.broadcast %115 : vector<16x1xf32> to vector<16x128xf32>
    %117 = arith.select %114, %116, %105 : vector<16x128xi1>, vector<16x128xf32>
    %118 = arith.mulf %80, %117 : vector<16x128xf32>
    %c0_35 = arith.constant 0 : index
    %c0_36 = arith.constant 0 : index
    %119 = vector.load %arg8[%c0_35, %c0_36] : memref<16x128xf32, #tpu.memory_space<vmem>>, vector<16x128xf32>
    tpu.vector_store %arg8[%c0_35, %c0_36], %118 {strides = array<i32>} : memref<16x128xf32, #tpu.memory_space<vmem>>, vector<16x128xf32>,
    return
  }
  func.func @transform_0(%arg0: i32) -> (i32, i32) {
    %c0_i32 = arith.constant 0 : i32
    %c0_i32_0 = arith.constant 0 : i32
    return %arg0, %c0_i32 : i32, i32
  }
  func.func @transform_1(%arg0: i32) -> (i32, i32) {
    %c0_i32 = arith.constant 0 : i32
    %c0_i32_0 = arith.constant 0 : i32
    %c0_i32_1 = arith.constant 0 : i32
    return %c0_i32, %c0_i32_0 : i32, i32
  }
  func.func @transform_2(%arg0: i32) -> (i32, i32) {
    %c0_i32 = arith.constant 0 : i32
    %c0_i32_0 = arith.constant 0 : i32
    %c0_i32_1 = arith.constant 0 : i32
    return %c0_i32, %c0_i32_0 : i32, i32
  }
  func.func @transform_3(%arg0: i32) -> (i32, i32) {
    %c0_i32 = arith.constant 0 : i32
    %c0_i32_0 = arith.constant 0 : i32
    %c0_i32_1 = arith.constant 0 : i32
    return %c0_i32, %c0_i32_0 : i32, i32
  }
  func.func @transform_4(%arg0: i32) -> (i32, i32) {
    %c0_i32 = arith.constant 0 : i32
    %c0_i32_0 = arith.constant 0 : i32
    %c0_i32_1 = arith.constant 0 : i32
    return %c0_i32, %c0_i32_0 : i32, i32
  }
  func.func @transform_5(%arg0: i32) -> (i32, i32) {
    %c0_i32 = arith.constant 0 : i32
    %c0_i32_0 = arith.constant 0 : i32
    %c0_i32_1 = arith.constant 0 : i32
    return %c0_i32, %c0_i32_0 : i32, i32
  }
  func.func @transform_6(%arg0: i32) -> (i32, i32) {
    %c0_i32 = arith.constant 0 : i32
    %c0_i32_0 = arith.constant 0 : i32
    %c0_i32_1 = arith.constant 0 : i32
    return %c0_i32, %c0_i32_0 : i32, i32
  }
  func.func @transform_7(%arg0: i32) -> (i32, i32) {
    %c0_i32 = arith.constant 0 : i32
    %c0_i32_0 = arith.constant 0 : i32
    return %arg0, %c0_i32 : i32, i32
  }
}

</mosaic_0001>

<llo_original>
// kernel: tpu_custom_call.1
$region0: #{tpu_custom_call.1}
  #allocation0 [shape = 'u32[]', space=smem, size = 0x4, offset = 0x4, fixed_abs, tag = 'smem constant byte address 0x4 - core index']
  #allocation1 [shape = 'u32[144,128]{1,0:T(1,128)}', space=vmem, size = 0x12000, scoped, tag = 'internal scratch']
  %s0 = inlined_call_operand.hbm [shape: f32[16,32], index: 0, kind: input, shape index: {}]
  %s1 = inlined_call_operand.hbm [shape: bf16[32,128], index: 1, kind: input, shape index: {}]
  %s2 = inlined_call_operand.vmem [shape: f32[1,128], index: 2, kind: input, shape index: {}]
  %s3 = inlined_call_operand.hbm [shape: bf16[128,128], index: 3, kind: input, shape index: {}]
  %s4 = inlined_call_operand.vmem [shape: f32[1,128], index: 4, kind: input, shape index: {}]
  %s5 = inlined_call_operand.hbm [shape: bf16[128,128], index: 5, kind: input, shape index: {}]
  %s6 = inlined_call_operand.vmem [shape: f32[1,128], index: 6, kind: input, shape index: {}]
  %s7 = inlined_call_operand.hbm [shape: f32[16,128], index: 7, kind: output, shape index: {}]
  %s8 = sld [smem:[#allocation0]]
  $region54: #{tpu_custom_call.1} parent=0
    _
  %s10 = ssub.s32 1, %s8
  %s11 = scalar_select 0, %s10, %s8
  $region1: #{tpu_custom_call.1} parent=0
    #allocation2 [shape = 'u8[8192]{0}', space=vmem, size = 0x2000, scoped, tag = 'input window, operand 0, single buffered']
    #allocation3 [shape = 's32[1]{0}', space=sflag, size = 0x4, scoped, tag = 'scoped memory for tpu_custom_call.1']
    #allocation4 [shape = 's32[1]{0}', space=sflag, size = 0x4, scoped, tag = 'scoped memory for tpu_custom_call.1']
    #allocation5 [shape = 'u8[8192]{0}', space=vmem, size = 0x2000, scoped, tag = 'input window, operand 1, single buffered']
    #allocation6 [shape = 's32[1]{0}', space=sflag, size = 0x4, scoped, tag = 'scoped memory for tpu_custom_call.1']
    #allocation7 [shape = 'u8[32768]{0}', space=vmem, size = 0x8000, scoped, tag = 'input window, operand 3, single buffered']
    #allocation8 [shape = 'u8[32768]{0}', space=vmem, size = 0x8000, scoped, tag = 'input window, operand 5, single buffered']
    #allocation9 [shape = 's32[1]{0}', space=sflag, size = 0x4, scoped, tag = 'scoped memory for tpu_custom_call.1']
    #allocation10 [shape = 'u8[8192]{0}', space=vmem, size = 0x2000, scoped, tag = 'output window, operand 0, single buffered']
    %12 = vsyncpa [#allocation3], 0
    %13 = vsyncpa [#allocation6], 0
    %14 = vsyncpa [#allocation9], 0
    %15 = vsyncpa [#allocation4], 0
    // Predicated region
    $region2: #{tpu_custom_call.1} parent=1 // pred_check
      _
    $region3: #{tpu_custom_call.1} parent=1 // pred_check_branch
      %17 = sbr.rel (0) target = $region5
    $region4: #{tpu_custom_call.1} parent=1 // pred_region
      %s19 = ssub.s32 256, 256
      %20 = vsyncadd [#allocation3], %s19
      %s21 = sshll.u32 [#allocation2], 4
      %s22 = int_to_ptr.vmem [resolvable:$true] %s21
      %27 = dma.hbm_to_vmem [thread:$0]  %s0, 256, %s22, [#allocation3], 128, 128, 8
    $region5: #{tpu_custom_call.1} parent=1 // pred_fallthru
      _
    // Predicated region
    $region6: #{tpu_custom_call.1} parent=1 // pred_check
      _
    $region7: #{tpu_custom_call.1} parent=1 // pred_check_branch
      %29 = sbr.rel (0) target = $region9
    $region8: #{tpu_custom_call.1} parent=1 // pred_region
      %s31 = ssub.s32 256, 256
      %32 = vsyncadd [#allocation6], %s31
      %s33 = sshll.u32 [#allocation5], 4
      %s34 = int_to_ptr.vmem [resolvable:$true] %s33
      %39 = dma.hbm_to_vmem [thread:$0]  %s1, 256, %s34, [#allocation6], 64, 64, 4
    $region9: #{tpu_custom_call.1} parent=1 // pred_fallthru
      _
    // Predicated region
    $region10: #{tpu_custom_call.1} parent=1 // pred_check
      _
    $region11: #{tpu_custom_call.1} parent=1 // pred_check_branch
      %41 = sbr.rel (0) target = $region13
    $region12: #{tpu_custom_call.1} parent=1 // pred_region
      _
    $region13: #{tpu_custom_call.1} parent=1 // pred_fallthru
      _
    // Predicated region
    $region14: #{tpu_custom_call.1} parent=1 // pred_check
      _
    $region15: #{tpu_custom_call.1} parent=1 // pred_check_branch
      %43 = sbr.rel (0) target = $region17
    $region16: #{tpu_custom_call.1} parent=1 // pred_region
      %s45 = ssub.s32 1024, 1024
      %46 = vsyncadd [#allocation6], %s45
      %s47 = sshll.u32 [#allocation7], 4
      %s48 = int_to_ptr.vmem [resolvable:$true] %s47
      %53 = dma.hbm_to_vmem [thread:$0]  %s3, 1024, %s48, [#allocation6], 64, 64, 4
    $region17: #{tpu_custom_call.1} parent=1 // pred_fallthru
      _
    // Predicated region
    $region18: #{tpu_custom_call.1} parent=1 // pred_check
      _
    $region19: #{tpu_custom_call.1} parent=1 // pred_check_branch
      %55 = sbr.rel (0) target = $region21
    $region20: #{tpu_custom_call.1} parent=1 // pred_region
      _
    $region21: #{tpu_custom_call.1} parent=1 // pred_fallthru
      _
    // Predicated region
    $region22: #{tpu_custom_call.1} parent=1 // pred_check
      _
    $region23: #{tpu_custom_call.1} parent=1 // pred_check_branch
      %57 = sbr.rel (0) target = $region25
    $region24: #{tpu_custom_call.1} parent=1 // pred_region
      %s59 = ssub.s32 1024, 1024
      %60 = vsyncadd [#allocation9], %s59
      %s61 = sshll.u32 [#allocation8], 4
      %s62 = int_to_ptr.vmem [resolvable:$true] %s61
      %67 = dma.hbm_to_vmem [thread:$0]  %s5, 1024, %s62, [#allocation9], 64, 64, 4
    $region25: #{tpu_custom_call.1} parent=1 // pred_fallthru
      _
    // Predicated region
    $region26: #{tpu_custom_call.1} parent=1 // pred_check
      _
    $region27: #{tpu_custom_call.1} parent=1 // pred_check_branch
      %69 = sbr.rel (0) target = $region29
    $region28: #{tpu_custom_call.1} parent=1 // pred_region
      _
    $region29: #{tpu_custom_call.1} parent=1 // pred_fallthru
      _
    // Predicated region
    $region30: #{tpu_custom_call.1} parent=1 // pred_check
      _
    $region31: #{tpu_custom_call.1} parent=1 // pred_check_branch
      %71 = sbr.rel (0) target = $region33
    $region32: #{tpu_custom_call.1} parent=1 // pred_region
      %72 = dma.done [#allocation3], 256
    $region33: #{tpu_custom_call.1} parent=1 // pred_fallthru
      _
    // Predicated region
    $region34: #{tpu_custom_call.1} parent=1 // pred_check
      _
    $region35: #{tpu_custom_call.1} parent=1 // pred_check_branch
      %74 = sbr.rel (0) target = $region37
    $region36: #{tpu_custom_call.1} parent=1 // pred_region
      %75 = dma.done [#allocation6], 256
    $region37: #{tpu_custom_call.1} parent=1 // pred_fallthru
      _
    // Predicated region
    $region38: #{tpu_custom_call.1} parent=1 // pred_check
      _
    $region39: #{tpu_custom_call.1} parent=1 // pred_check_branch
      %77 = sbr.rel (0) target = $region41
    $region40: #{tpu_custom_call.1} parent=1 // pred_region
      %78 = dma.done [#allocation6], 1024
    $region41: #{tpu_custom_call.1} parent=1 // pred_fallthru
      _
    // Predicated region
    $region42: #{tpu_custom_call.1} parent=1 // pred_check
      _
    $region43: #{tpu_custom_call.1} parent=1 // pred_check_branch
      %80 = sbr.rel (0) target = $region45
    $region44: #{tpu_custom_call.1} parent=1 // pred_region
      %81 = dma.done [#allocation9], 1024
    $region45: #{tpu_custom_call.1} parent=1 // pred_fallthru
      _
    %v83 = vld [vmem:[#allocation2] sm:$0xff]
    %v84 = vld [vmem:[#allocation2 + $0x8] sm:$0xff]
    %v85 = vpack.c.bf16 %v84, %v83
    %v86 = vld [vmem:[#allocation5] sm:$0xf]
    %v87 = vld [vmem:[#allocation5 + $0x4] sm:$0xf]
    %v88 = vld [vmem:[#allocation5 + $0x8] sm:$0xf]
    %v89 = vld [vmem:[#allocation5 + $0xc] sm:$0xf]
    %v90 = vld [vmem:[%s2] sm:$0x1]
    %v92 = vlaneseq
    %v93 = vshrl.u32 %v92, 7
    %v94 = vsub.s32 0, %v93
    %v95 = vrot.slane %v90, %v94
    %v101 = vunpack.c.l.b16 %v86
    %v102 = vunpack.c.l.b16 %v87
    %v103 = vunpack.c.l.b16 %v88
    %v104 = vunpack.c.l.b16 %v89
    %v105 = vpack.c.b16 %v102, %v101
    %v106 = vpack.c.b16 %v104, %v103
    %vm109 = vcmask 261120
    %v111 = vsel %vm109, %v85, 0
    %113 = vmatprep.subr.bf16.mxu0 0
    %114 = vmatpush1.bf16.msra.mxu0 %v105
    %115 = vmatprep.subr.bf16.mxu0 0
    %116 = vmatpush1.bf16.msra.mxu0 %v106
    %117 = vmatprep.subr.bf16.mxu0 0
    %118 = vmatpush1.bf16.msra.mxu0 0
    %119 = vmatprep.subr.bf16.mxu0 0
    %120 = vmatpush1.bf16.msra.mxu0 0
    %121 = vmatprep.subr.bf16.mxu0 0
    %122 = vmatpush1.bf16.msra.mxu0 0
    %123 = vmatprep.subr.bf16.mxu0 0
    %124 = vmatpush1.bf16.msra.mxu0 0
    %125 = vmatprep.subr.bf16.mxu0 0
    %126 = vmatpush1.bf16.msra.mxu0 0
    %127 = vmatprep.subr.bf16.mxu0 0
    %128 = vmatpush1.bf16.msra.mxu0 0
    %129 = vmatprep.subr.bf16.mxu0 0
    %130 = vmatpush1.bf16.msra.mxu0 0
    %131 = vmatprep.subr.bf16.mxu0 0
    %132 = vmatpush1.bf16.msra.mxu0 0
    %133 = vmatprep.subr.bf16.mxu0 0
    %134 = vmatpush1.bf16.msra.mxu0 0
    %135 = vmatprep.subr.bf16.mxu0 0
    %136 = vmatpush1.bf16.msra.mxu0 0
    %137 = vmatprep.subr.bf16.mxu0 0
    %138 = vmatpush1.bf16.msra.mxu0 0
    %139 = vmatprep.subr.bf16.mxu0 0
    %140 = vmatpush1.bf16.msra.mxu0 0
    %141 = vmatprep.subr.bf16.mxu0 0
    %142 = vmatpush1.bf16.msra.mxu0 0
    %143 = vmatprep.subr.bf16.mxu0 0
    %144 = vmatpush1.bf16.msra.mxu0 0
    %145 = vmatprep.mubr.bf16.mxu0 0
    %146 = vmatmul.mubr.bf16.gmra.mrb[0].mxu0 %v111
    %v147 = vpop.f32.mrb[0].mxu0
    %v148 = vadd.f32 %v95, %v147
    %v149 = vpop.f32.mrb[0].mxu0
    %v150 = vpop.f32.mrb[0].mxu0
    %v151 = vadd.f32 %v95, %v150
    %v152 = vpop.f32.mrb[0].mxu0
    %153 = vdwg.mxu0
    %v154 = vmax.f32 %v148, 0.0
    %v155 = vmax.f32 %v151, 0.0
    %v156 = vpack.c.bf16 %v155, %v154
    %v157 = vld [vmem:[#allocation7] sm:$0xf]
    %v158 = vld [vmem:[#allocation7 + $0x4] sm:$0xf]
    %v159 = vld [vmem:[#allocation7 + $0x8] sm:$0xf]
    %v160 = vld [vmem:[#allocation7 + $0xc] sm:$0xf]
    %v161 = vld [vmem:[#allocation7 + $0x10] sm:$0xf]
    %v162 = vld [vmem:[#allocation7 + $0x14] sm:$0xf]
    %v163 = vld [vmem:[#allocation7 + $0x18] sm:$0xf]
    %v164 = vld [vmem:[#allocation7 + $0x1c] sm:$0xf]
    %v165 = vld [vmem:[#allocation7 + $0x20] sm:$0xf]
    %v166 = vld [vmem:[#allocation7 + $0x24] sm:$0xf]
    %v167 = vld [vmem:[#allocation7 + $0x28] sm:$0xf]
    %v168 = vld [vmem:[#allocation7 + $0x2c] sm:$0xf]
    %v169 = vld [vmem:[#allocation7 + $0x30] sm:$0xf]
    %v170 = vld [vmem:[#allocation7 + $0x34] sm:$0xf]
    %v171 = vld [vmem:[#allocation7 + $0x38] sm:$0xf]
    %v172 = vld [vmem:[#allocation7 + $0x3c] sm:$0xf]
    %v173 = vld [vmem:[%s4] sm:$0x1]
    %v175 = vlaneseq
    %v176 = vshrl.u32 %v175, 7
    %v177 = vsub.s32 0, %v176
    %v178 = vrot.slane %v173, %v177
    %v196 = vunpack.c.l.b16 %v157
    %v197 = vunpack.c.l.b16 %v158
    %v198 = vunpack.c.l.b16 %v159
    %v199 = vunpack.c.l.b16 %v160
    %v200 = vunpack.c.l.b16 %v161
    %v201 = vunpack.c.l.b16 %v162
    %v202 = vunpack.c.l.b16 %v163
    %v203 = vunpack.c.l.b16 %v164
    %v204 = vunpack.c.l.b16 %v165
    %v205 = vunpack.c.l.b16 %v166
    %v206 = vunpack.c.l.b16 %v167
    %v207 = vunpack.c.l.b16 %v168
    %v208 = vunpack.c.l.b16 %v169
    %v209 = vunpack.c.l.b16 %v170
    %v210 = vunpack.c.l.b16 %v171
    %v211 = vunpack.c.l.b16 %v172
    %v212 = vpack.c.b16 %v197, %v196
    %v213 = vpack.c.b16 %v199, %v198
    %v214 = vpack.c.b16 %v201, %v200
    %v215 = vpack.c.b16 %v203, %v202
    %v216 = vpack.c.b16 %v205, %v204
    %v217 = vpack.c.b16 %v207, %v206
    %v218 = vpack.c.b16 %v209, %v208
    %v219 = vpack.c.b16 %v211, %v210
    %228 = vmatprep.subr.bf16.mxu0 0
    %229 = vmatpush1.bf16.msra.mxu0 %v212
    %230 = vmatprep.subr.bf16.mxu0 0
    %231 = vmatpush1.bf16.msra.mxu0 %v213
    %232 = vmatprep.subr.bf16.mxu0 0
    %233 = vmatpush1.bf16.msra.mxu0 %v214
    %234 = vmatprep.subr.bf16.mxu0 0
    %235 = vmatpush1.bf16.msra.mxu0 %v215
    %236 = vmatprep.subr.bf16.mxu0 0
    %237 = vmatpush1.bf16.msra.mxu0 %v216
    %238 = vmatprep.subr.bf16.mxu0 0
    %239 = vmatpush1.bf16.msra.mxu0 %v217
    %240 = vmatprep.subr.bf16.mxu0 0
    %241 = vmatpush1.bf16.msra.mxu0 %v218
    %242 = vmatprep.subr.bf16.mxu0 0
    %243 = vmatpush1.bf16.msra.mxu0 %v219
    %244 = vmatprep.subr.bf16.mxu0 0
    %245 = vmatpush1.bf16.msra.mxu0 0
    %246 = vmatprep.subr.bf16.mxu0 0
    %247 = vmatpush1.bf16.msra.mxu0 0
    %248 = vmatprep.subr.bf16.mxu0 0
    %249 = vmatpush1.bf16.msra.mxu0 0
    %250 = vmatprep.subr.bf16.mxu0 0
    %251 = vmatpush1.bf16.msra.mxu0 0
    %252 = vmatprep.subr.bf16.mxu0 0
    %253 = vmatpush1.bf16.msra.mxu0 0
    %254 = vmatprep.subr.bf16.mxu0 0
    %255 = vmatpush1.bf16.msra.mxu0 0
    %256 = vmatprep.subr.bf16.mxu0 0
    %257 = vmatpush1.bf16.msra.mxu0 0
    %258 = vmatprep.subr.bf16.mxu0 0
    %259 = vmatpush1.bf16.msra.mxu0 0
    %260 = vmatprep.mubr.bf16.mxu0 0
    %261 = vmatmul.mubr.bf16.gmra.mrb[0].mxu0 %v156
    %v262 = vpop.f32.mrb[0].mxu0
    %v263 = vadd.f32 %v178, %v262
    %v264 = vpop.f32.mrb[0].mxu0
    %v265 = vpop.f32.mrb[0].mxu0
    %v266 = vadd.f32 %v178, %v265
    %v267 = vpop.f32.mrb[0].mxu0
    %268 = vdwg.mxu0
    %v269 = vmax.f32 %v263, 0.0
    %v270 = vmax.f32 %v266, 0.0
    %v271 = vpack.c.bf16 %v270, %v269
    %v272 = vld [vmem:[#allocation8] sm:$0xf]
    %v273 = vld [vmem:[#allocation8 + $0x4] sm:$0xf]
    %v274 = vld [vmem:[#allocation8 + $0x8] sm:$0xf]
    %v275 = vld [vmem:[#allocation8 + $0xc] sm:$0xf]
    %v276 = vld [vmem:[#allocation8 + $0x10] sm:$0xf]
    %v277 = vld [vmem:[#allocation8 + $0x14] sm:$0xf]
    %v278 = vld [vmem:[#allocation8 + $0x18] sm:$0xf]
    %v279 = vld [vmem:[#allocation8 + $0x1c] sm:$0xf]
    %v280 = vld [vmem:[#allocation8 + $0x20] sm:$0xf]
    %v281 = vld [vmem:[#allocation8 + $0x24] sm:$0xf]
    %v282 = vld [vmem:[#allocation8 + $0x28] sm:$0xf]
    %v283 = vld [vmem:[#allocation8 + $0x2c] sm:$0xf]
    %v284 = vld [vmem:[#allocation8 + $0x30] sm:$0xf]
    %v285 = vld [vmem:[#allocation8 + $0x34] sm:$0xf]
    %v286 = vld [vmem:[#allocation8 + $0x38] sm:$0xf]
    %v287 = vld [vmem:[#allocation8 + $0x3c] sm:$0xf]
    %v288 = vld [vmem:[%s6] sm:$0x1]
    %v290 = vlaneseq
    %v291 = vshrl.u32 %v290, 7
    %v292 = vsub.s32 0, %v291
    %v293 = vrot.slane %v288, %v292
    %v311 = vunpack.c.l.b16 %v272
    %v312 = vunpack.c.l.b16 %v273
    %v313 = vunpack.c.l.b16 %v274
    %v314 = vunpack.c.l.b16 %v275
    %v315 = vunpack.c.l.b16 %v276
    %v316 = vunpack.c.l.b16 %v277
    %v317 = vunpack.c.l.b16 %v278
    %v318 = vunpack.c.l.b16 %v279
    %v319 = vunpack.c.l.b16 %v280
    %v320 = vunpack.c.l.b16 %v281
    %v321 = vunpack.c.l.b16 %v282
    %v322 = vunpack.c.l.b16 %v283
    %v323 = vunpack.c.l.b16 %v284
    %v324 = vunpack.c.l.b16 %v285
    %v325 = vunpack.c.l.b16 %v286
    %v326 = vunpack.c.l.b16 %v287
    %v327 = vpack.c.b16 %v312, %v311
    %v328 = vpack.c.b16 %v314, %v313
    %v329 = vpack.c.b16 %v316, %v315
    %v330 = vpack.c.b16 %v318, %v317
    %v331 = vpack.c.b16 %v320, %v319
    %v332 = vpack.c.b16 %v322, %v321
    %v333 = vpack.c.b16 %v324, %v323
    %v334 = vpack.c.b16 %v326, %v325
    %343 = vmatprep.subr.bf16.mxu0 0
    %344 = vmatpush1.bf16.msra.mxu0 %v327
    %345 = vmatprep.subr.bf16.mxu0 0
    %346 = vmatpush1.bf16.msra.mxu0 %v328
    %347 = vmatprep.subr.bf16.mxu0 0
    %348 = vmatpush1.bf16.msra.mxu0 %v329
    %349 = vmatprep.subr.bf16.mxu0 0
    %350 = vmatpush1.bf16.msra.mxu0 %v330
    %351 = vmatprep.subr.bf16.mxu0 0
    %352 = vmatpush1.bf16.msra.mxu0 %v331
    %353 = vmatprep.subr.bf16.mxu0 0
    %354 = vmatpush1.bf16.msra.mxu0 %v332
    %355 = vmatprep.subr.bf16.mxu0 0
    %356 = vmatpush1.bf16.msra.mxu0 %v333
    %357 = vmatprep.subr.bf16.mxu0 0
    %358 = vmatpush1.bf16.msra.mxu0 %v334
    %359 = vmatprep.subr.bf16.mxu0 0
    %360 = vmatpush1.bf16.msra.mxu0 0
    %361 = vmatprep.subr.bf16.mxu0 0
    %362 = vmatpush1.bf16.msra.mxu0 0
    %363 = vmatprep.subr.bf16.mxu0 0
    %364 = vmatpush1.bf16.msra.mxu0 0
    %365 = vmatprep.subr.bf16.mxu0 0
    %366 = vmatpush1.bf16.msra.mxu0 0
    %367 = vmatprep.subr.bf16.mxu0 0
    %368 = vmatpush1.bf16.msra.mxu0 0
    %369 = vmatprep.subr.bf16.mxu0 0
    %370 = vmatpush1.bf16.msra.mxu0 0
    %371 = vmatprep.subr.bf16.mxu0 0
    %372 = vmatpush1.bf16.msra.mxu0 0
    %373 = vmatprep.subr.bf16.mxu0 0
    %374 = vmatpush1.bf16.msra.mxu0 0
    %375 = vmatprep.mubr.bf16.mxu0 0
    %376 = vmatmul.mubr.bf16.gmra.mrb[0].mxu0 %v271
    %v377 = vpop.f32.mrb[0].mxu0
    %v378 = vadd.f32 %v293, %v377
    %v379 = vpop.f32.mrb[0].mxu0
    %v380 = vpop.f32.mrb[0].mxu0
    %v381 = vadd.f32 %v293, %v380
    %v382 = vpop.f32.mrb[0].mxu0
    %383 = vdwg.mxu0
    %v384 = vlaneseq
    %v385 = vand.u32 %v384, 127
    %vm386 = vcmp.ge.s32.totalorder %v385, 0
    %vm387 = vcmp.lt.s32.totalorder %v385, 3
    %vm388 = vmand %vm386, %vm387
    %v389 = vsel %vm388, 1, 0
    %vm390 = vcmp.eq.s32.totalorder %v389, 1
    %v391 = vsel %vm390, %v378, -1e+30
    %v392 = vsel %vm390, %v381, -1e+30
    %393 = vmax.xlane.f32.xlu0 %v391
    %v394 = vpop.xlane.xlu0 %393
    %395 = vmax.xlane.f32.xlu0 %v392
    %v396 = vpop.xlane.xlu0 %395
    %v397 = vsel %vm390, %v394, 0.0
    %v398 = vsel %vm390, %v396, 0.0
    %vm399 = vcmp.ge.s32.totalorder %v385, 3
    %vm400 = vcmp.lt.s32.totalorder %v385, 7
    %vm401 = vmand %vm399, %vm400
    %v402 = vsel %vm401, 1, 0
    %vm403 = vcmp.eq.s32.totalorder %v402, 1
    %v404 = vsel %vm403, %v378, -1e+30
    %v405 = vsel %vm403, %v381, -1e+30
    %406 = vmax.xlane.f32.xlu0 %v404
    %v407 = vpop.xlane.xlu0 %406
    %408 = vmax.xlane.f32.xlu0 %v405
    %v409 = vpop.xlane.xlu0 %408
    %v410 = vsel %vm403, %v407, %v397
    %v411 = vsel %vm403, %v409, %v398
    %vm412 = vcmp.ge.s32.totalorder %v385, 7
    %vm413 = vcmp.lt.s32.totalorder %v385, 12
    %vm414 = vmand %vm412, %vm413
    %v415 = vsel %vm414, 1, 0
    %vm416 = vcmp.eq.s32.totalorder %v415, 1
    %v417 = vsel %vm416, %v378, -1e+30
    %v418 = vsel %vm416, %v381, -1e+30
    %419 = vmax.xlane.f32.xlu0 %v417
    %v420 = vpop.xlane.xlu0 %419
    %421 = vmax.xlane.f32.xlu0 %v418
    %v422 = vpop.xlane.xlu0 %421
    %v423 = vsel %vm416, %v420, %v410
    %v424 = vsel %vm416, %v422, %v411
    %v425 = vsub.f32 %v378, %v423
    %v426 = vsub.f32 %v381, %v424
    %v427 = vmul.f32 %v425, 1.442695
    %v428 = vpow.pop %v427
    %v429 = vmul.f32 %v426, 1.442695
    %v430 = vpow.pop %v429
    %v431 = vsel %vm413, 1, 0
    %vm432 = vcmp.eq.s32.totalorder %v431, 1
    %v433 = vsel %vm432, %v428, 0.0
    %v434 = vsel %vm432, %v430, 0.0
    %v435 = vsel %vm390, %v433, 0.0
    %v436 = vsel %vm390, %v434, 0.0
    %437 = vadd.xlane.f32.xlu0 %v435
    %v438 = vpop.xlane.xlu0 %437
    %439 = vadd.xlane.f32.xlu0 %v436
    %v440 = vpop.xlane.xlu0 %439
    %v441 = vrcp.pop %v438
    %v442 = vrcp.pop %v440
    %v443 = vsel %vm390, %v441, 0.0
    %v444 = vsel %vm390, %v442, 0.0
    %v445 = vsel %vm403, %v433, 0.0
    %v446 = vsel %vm403, %v434, 0.0
    %447 = vadd.xlane.f32.xlu0 %v445
    %v448 = vpop.xlane.xlu0 %447
    %449 = vadd.xlane.f32.xlu0 %v446
    %v450 = vpop.xlane.xlu0 %449
    %v451 = vrcp.pop %v448
    %v452 = vrcp.pop %v450
    %v453 = vsel %vm403, %v451, %v443
    %v454 = vsel %vm403, %v452, %v444
    %v455 = vsel %vm416, %v433, 0.0
    %v456 = vsel %vm416, %v434, 0.0
    %457 = vadd.xlane.f32.xlu0 %v455
    %v458 = vpop.xlane.xlu0 %457
    %459 = vadd.xlane.f32.xlu0 %v456
    %v460 = vpop.xlane.xlu0 %459
    %v461 = vrcp.pop %v458
    %v462 = vrcp.pop %v460
    %v463 = vsel %vm416, %v461, %v453
    %v464 = vsel %vm416, %v462, %v454
    %v465 = vmul.f32 %v433, %v463
    %v466 = vmul.f32 %v434, %v464
    %467 = vst [vmem:[#allocation10] sm:$0xff] %v465
    %468 = vst [vmem:[#allocation10 + $0x8] sm:$0xff] %v466
    // Predicated region
    $region46: #{tpu_custom_call.1} parent=1 // pred_check
      _
    $region47: #{tpu_custom_call.1} parent=1 // pred_check_branch
      %470 = sbr.rel (0) target = $region49
    $region48: #{tpu_custom_call.1} parent=1 // pred_region
      %s472 = ssub.s32 256, 256
      %473 = vsyncadd [#allocation4], %s472
      %s474 = sshll.u32 [#allocation10], 4
      %s475 = int_to_ptr.vmem [resolvable:$true] %s474
      %480 = dma.vmem_to_hbm [thread:$0]  %s475, 256, %s7, [#allocation4], 128, 128, 8
    $region49: #{tpu_custom_call.1} parent=1 // pred_fallthru
      _
    // Predicated region
    $region50: #{tpu_custom_call.1} parent=1 // pred_check
      _
    $region51: #{tpu_custom_call.1} parent=1 // pred_check_branch
      %482 = sbr.rel (0) target = $region53
    $region52: #{tpu_custom_call.1} parent=1 // pred_region
      %483 = dma.done [#allocation4], 256
    $region53: #{tpu_custom_call.1} parent=1 // pred_fallthru
      _
    %484 = vsyncpa [#allocation3], 1
    %485 = vsyncpa [#allocation6], 1
    %486 = vsyncpa [#allocation9], 1
    %487 = vsyncpa [#allocation4], 1

</llo_original>
